<compile_context>
chip_gen: v7x
topology: tpu7x:2x2x1
jax: 0.10.0
libtpu: 0.0.40
codegen_flags: <defaults>
</compile_context>

<pallas_src>
import functools

import jax
import jax.numpy as jnp
from jax.experimental import pallas as pl
from jax.experimental.pallas import tpu as pltpu

_LANE = 128
# Per-buffer tile cap (~2 MiB). 3 buffers (a, b, out) x 2-deep double
# buffering ~= 12 MiB peak VMEM -- safe on v5e/v6e/v7x default scoped limits.
_MAX_TILE_BYTES = 2 * 1024 * 1024


def _add_kernel(a_ref, b_ref, o_ref):
    # Elementwise add of the resident VMEM tiles (VPU only, mem-bound).
    o_ref[...] = a_ref[...] + b_ref[...]


@jax.jit
def pallas_add(a: jax.Array, b: jax.Array) -> jax.Array:
    """Elementwise a + b via a Pallas TPU kernel, lane-dense layout."""
    assert a.shape == b.shape and a.dtype == b.dtype
    orig_shape = a.shape
    dtype = a.dtype
    total = a.size
    itemsize = jnp.dtype(dtype).itemsize
    # Sublane alignment so packed dtypes (bf16/int8) still fill whole vregs.
    sublane_align = max(8, 32 // itemsize)

    # --- reshape to lane-dense (rows, 128); pad with zeros if needed (glue) ---
    a_flat = a.reshape(-1)
    b_flat = b.reshape(-1)
    padded_total = ((total + _LANE - 1) // _LANE) * _LANE
    if padded_total != total:
        pad = padded_total - total
        a_flat = jnp.pad(a_flat, (0, pad))
        b_flat = jnp.pad(b_flat, (0, pad))
    rows = padded_total // _LANE
    cols = _LANE
    a2 = a_flat.reshape(rows, cols)
    b2 = b_flat.reshape(rows, cols)

    max_block_rows = max(sublane_align, _MAX_TILE_BYTES // (cols * itemsize))
    max_block_rows -= max_block_rows % sublane_align
    max_block_rows = max(sublane_align, max_block_rows)

    if rows <= max_block_rows:
        # Small input: single full-array block, no grid, no index maps.
        out2 = pl.pallas_call(
            _add_kernel,
            out_shape=jax.ShapeDtypeStruct((rows, cols), dtype),
        )(a2, b2)
    else:
        # Large input: tile over rows, lane-dense blocks, row axis parallel
        # (enables megacore sharding on v7x; pure HBM-bandwidth bound op).
        block_rows = max_block_rows
        num_blocks = pl.cdiv(rows, block_rows)
        out2 = pl.pallas_call(
            _add_kernel,
            out_shape=jax.ShapeDtypeStruct((rows, cols), dtype),
            grid=(num_blocks,),
            in_specs=[
                pl.BlockSpec((block_rows, cols), lambda i: (i, 0)),
                pl.BlockSpec((block_rows, cols), lambda i: (i, 0)),
            ],
            out_specs=pl.BlockSpec((block_rows, cols), lambda i: (i, 0)),
            compiler_params=pltpu.CompilerParams(
                dimension_semantics=("parallel",),
            ),
        )(a2, b2)

    out_flat = out2.reshape(-1)
    if padded_total != total:
        out_flat = out_flat[:total]
    return out_flat.reshape(orig_shape)


def additional_layer_forward(x: dict) -> dict:
    """JAX/Pallas equivalent of AdditionalLayer.forward."""
    mid_output = x["re_mid_output"]
    multi_output = x["multi_output"]
    output = pallas_add(mid_output, multi_output)
    x = dict(x)  # PyTorch mutates in place; value semantics are identical.
    x["conv1_input"] = output
    return x


if __name__ == "__main__":
    key = jax.random.PRNGKey(0)
    k1, k2, k3, k4, k5, k6 = jax.random.split(key, 6)

    # --- primary check: module's small NCHW shape -------------------------
    shape = (2, 4, 16, 16)
    re_mid_output = jax.random.normal(k1, shape, dtype=jnp.float32)
    multi_output = jax.random.normal(k2, shape, dtype=jnp.float32)
    x = {"re_mid_output": re_mid_output, "multi_output": multi_output}
    out = additional_layer_forward(x)
    conv1_input = jax.block_until_ready(out["conv1_input"])
    ref = re_mid_output + multi_output
    assert conv1_input.shape == shape
    assert jnp.allclose(conv1_input, ref, atol=1e-6, rtol=1e-6)

    # --- secondary check: larger activation exercises the tiled path ------
    big_shape = (2, 16, 256, 128)  # 1,048,576 elems -> rows=8192 > 4096 block
    a_big = jax.random.normal(k3, big_shape, dtype=jnp.float32)
    b_big = jax.random.normal(k4, big_shape, dtype=jnp.float32)
    out_big = jax.block_until_ready(pallas_add(a_big, b_big))
    assert jnp.allclose(out_big, a_big + b_big, atol=1e-6, rtol=1e-6)

    # --- secondary check: non-128-divisible size exercises the pad path ---
    odd_shape = (3, 5, 7)
    a_odd = jax.random.normal(k5, odd_shape, dtype=jnp.float32)
    b_odd = jax.random.normal(k6, odd_shape, dtype=jnp.float32)
    out_odd = jax.block_until_ready(pallas_add(a_odd, b_odd))
    assert jnp.allclose(out_odd, a_odd + b_odd, atol=1e-6, rtol=1e-6)

    # --- secondary check: bf16 exercises dtype-aware sublane alignment ----
    a_bf = a_big.astype(jnp.bfloat16)
    b_bf = b_big.astype(jnp.bfloat16)
    out_bf = jax.block_until_ready(pallas_add(a_bf, b_bf))
    assert jnp.allclose(out_bf.astype(jnp.float32),
                        (a_bf + b_bf).astype(jnp.float32), atol=1e-2, rtol=1e-2)

    print("KERNEL_OK")
</pallas_src>

<mosaic_0001>
module attributes {stable_mosaic.version = 11 : i64} {
  func.func @_add_kernel(%arg0: memref<16x128xf32, #tpu.memory_space<vmem>>, %arg1: memref<16x128xf32, #tpu.memory_space<vmem>>, %arg2: memref<16x128xf32, #tpu.memory_space<vmem>>) attributes {dimension_semantics = [], scalar_prefetch = 0 : i64, scratch_operands = 0 : i64, tpu.core_type = #tpu.core_type<tc>} {
    %c0 = arith.constant 0 : index
    %c0_0 = arith.constant 0 : index
    %0 = vector.load %arg0[%c0, %c0_0] : memref<16x128xf32, #tpu.memory_space<vmem>>, vector<16x128xf32>
    %c0_1 = arith.constant 0 : index
    %c0_2 = arith.constant 0 : index
    %1 = vector.load %arg1[%c0_1, %c0_2] : memref<16x128xf32, #tpu.memory_space<vmem>>, vector<16x128xf32>
    %2 = arith.addf %0, %1 : vector<16x128xf32>
    %c0_3 = arith.constant 0 : index
    %c0_4 = arith.constant 0 : index
    %3 = vector.load %arg2[%c0_3, %c0_4] : memref<16x128xf32, #tpu.memory_space<vmem>>, vector<16x128xf32>
    tpu.vector_store %arg2[%c0_3, %c0_4], %2 {strides = array<i32>} : memref<16x128xf32, #tpu.memory_space<vmem>>, vector<16x128xf32>,
    return
  }
}

</mosaic_0001>

<llo_original>
// kernel: pallas_add.1
$region0: #{pallas_add.1}
  #allocation0 [shape = 'u32[]', space=smem, size = 0x4, offset = 0x4, fixed_abs, tag = 'smem constant byte address 0x4 - core index']
  #allocation1 [shape = 'u32[144,128]{1,0:T(1,128)}', space=vmem, size = 0x12000, scoped, tag = 'internal scratch']
  %s0 = inlined_call_operand.vmem [shape: f32[16,128], index: 0, kind: input, shape index: {}]
  %s1 = inlined_call_operand.vmem [shape: f32[16,128], index: 1, kind: input, shape index: {}]
  %s2 = inlined_call_operand.vmem [shape: f32[16,128], index: 2, kind: output, shape index: {}]
  %s3 = sld [smem:[#allocation0]]
  $region18: #{pallas_add.1} parent=0
    _
  %s5 = ssub.s32 1, %s3
  %s6 = scalar_select 0, %s5, %s3
  // Predicated region
  $region2: #{pallas_add.1} parent=0 // pred_check
    _
  $region3: #{pallas_add.1} parent=0 // pred_check_branch
    %8 = sbr.rel (0) target = $region5
  $region4: #{pallas_add.1} parent=0 // pred_region
    _
  $region5: #{pallas_add.1} parent=0 // pred_fallthru
    _
  // Predicated region
  $region6: #{pallas_add.1} parent=0 // pred_check
    _
  $region7: #{pallas_add.1} parent=0 // pred_check_branch
    %10 = sbr.rel (0) target = $region9
  $region8: #{pallas_add.1} parent=0 // pred_region
    _
  $region9: #{pallas_add.1} parent=0 // pred_fallthru
    _
  %v11 = vld [vmem:[%s0] sm:$0xff]
  %v12 = vld [vmem:[%s0 + $0x8] sm:$0xff]
  %v13 = vld [vmem:[%s1] sm:$0xff]
  %v14 = vld [vmem:[%s1 + $0x8] sm:$0xff]
  %v15 = vadd.f32 %v11, %v13
  %v16 = vadd.f32 %v12, %v14
  %17 = vst [vmem:[%s2] sm:$0xff] %v15
  %18 = vst [vmem:[%s2 + $0x8] sm:$0xff] %v16
  // Predicated region
  $region10: #{pallas_add.1} parent=0 // pred_check
    _
  $region11: #{pallas_add.1} parent=0 // pred_check_branch
    %20 = sbr.rel (0) target = $region13
  $region12: #{pallas_add.1} parent=0 // pred_region
    _
  $region13: #{pallas_add.1} parent=0 // pred_fallthru
    _
  // Predicated region
  $region14: #{pallas_add.1} parent=0 // pred_check
    _
  $region15: #{pallas_add.1} parent=0 // pred_check_branch
    %22 = sbr.rel (0) target = $region17
  $region16: #{pallas_add.1} parent=0 // pred_region
    _
  $region17: #{pallas_add.1} parent=0 // pred_fallthru
    _

</llo_original>
